<compile_context>
chip_gen: v5e
topology: v5e:2x2
jax: 0.10.0
libtpu: 0.0.40
codegen_flags: <defaults>
</compile_context>

<pallas_src>
import functools

import jax
import jax.numpy as jnp
from jax import lax
from jax.experimental import pallas as pl
from jax.experimental.pallas import tpu as pltpu


def _gelu_exact(x):
    # exact (erf) GELU, matching torch.nn.GELU() default
    return 0.5 * x * (1.0 + lax.erf(x * (1.0 / jnp.sqrt(2.0).astype(x.dtype))))


def _slicesamp_kernel(x_ref, wrow_ref, b1_ref, wbig_ref, b2_ref, out_ref, *, c4):
    # x_ref    : (1, Hs, Ws*C4)   space-to-depth input, W packed into the lane axis
    # wrow_ref : (9, 1, Ws*C4)    depthwise taps (ky*3+kx), BN1 scale folded, W-tiled,
    #                             out-of-image horizontal taps zeroed at the W edges
    # b1_ref   : (1, Ws*C4)       folded BN1 bias (W-tiled)
    # wbig_ref : (Ws*C4, Ws*C2)   block-diagonal pointwise 1x1 weights, BN2 scale folded
    # b2_ref   : (1, Ws*C2)       folded BN2 bias (W-tiled)
    # out_ref  : (1, Hs, Ws*C2)
    hs, wc4 = x_ref.shape[1], x_ref.shape[2]

    x = x_ref[0]                                      # (Hs, Ws*C4)

    # horizontal (kx) taps: lane roll by +/- C4 (XLU). The wrapped pixel column at the image
    # edge is multiplied by zeroed edge weights, so no extra masking is needed here.
    xl = pltpu.roll(x, shift=wc4 - c4, axis=1)        # pixel w+1 brought to position w
    xr = pltpu.roll(x, shift=c4, axis=1)              # pixel w-1 brought to position w

    def hconv(k):                                     # 1-D horizontal conv for kernel row k
        return (xr * wrow_ref[3 * k + 0]
                + x * wrow_ref[3 * k + 1]
                + xl * wrow_ref[3 * k + 2])

    r0, r1, r2 = hconv(0), hconv(1), hconv(2)

    # vertical (ky) taps: sublane roll + edge mask (zero contribution outside the image)
    row = lax.broadcasted_iota(jnp.int32, (hs, wc4), 0)
    acc = (r1
           + jnp.where(row > 0, pltpu.roll(r0, shift=1, axis=0), 0.0)
           + jnp.where(row < hs - 1, pltpu.roll(r2, shift=hs - 1, axis=0), 0.0))

    # BN1 (scale already folded into the taps) bias + exact GELU
    dw = _gelu_exact(acc + b1_ref[...])               # (Hs, Ws*C4)

    # pointwise 1x1 conv as one block-diagonal matmul over the packed lane axis (MXU)
    y = jnp.dot(dw, wbig_ref[...], preferred_element_type=jnp.float32)   # (Hs, Ws*C2)
    out_ref[0] = _gelu_exact(y + b2_ref[...]).astype(out_ref.dtype)


def slicesamp_pallas(x_nchw, w_dw, bn1, w_pw, bn2):
    """x_nchw: (N, C1, H, W). Returns (N, C2, H//2, W//2) to match the PyTorch output layout."""
    N, C1, H, W = x_nchw.shape
    C4 = 4 * C1
    C2 = w_pw.shape[-1]
    Hs, Ws = H // 2, W // 2
    WC4, WC2 = Ws * C4, Ws * C2

    # --- glue: space-to-depth (matches torch.cat order) + NCHW->NHWC + pack W into lanes ---
    # (no jnp.pad: the conv halo is handled inside the kernel)
    x_s2d = jnp.concatenate(
        [x_nchw[:, :, 0::2, 0::2],
         x_nchw[:, :, 1::2, 0::2],
         x_nchw[:, :, 0::2, 1::2],
         x_nchw[:, :, 1::2, 1::2]], axis=1)                       # (N, 4*C1, Hs, Ws)
    x_pack = jnp.transpose(x_s2d, (0, 2, 3, 1)).reshape(N, Hs, WC4).astype(jnp.float32)

    # --- fold BatchNorm (inference semantics) into per-channel scale/bias ---
    def fold(bn):
        gamma, beta, mean, var, eps = bn
        scale = gamma / jnp.sqrt(var + eps)
        bias = beta - mean * scale
        return scale.astype(jnp.float32), bias.astype(jnp.float32)

    s1, b1 = fold(bn1)   # (C4,), (C4,)
    s2, b2 = fold(bn2)   # (C2,), (C2,)

    # depthwise taps: fold BN1 scale, tile across W into the lane axis, zero the out-of-image
    # horizontal taps at the W edges (this replaces explicit edge masking in the kernel).
    w_dw_s = w_dw.astype(jnp.float32) * s1[None, None, :]          # (3, 3, C4)
    w_tiled = jnp.broadcast_to(w_dw_s[:, :, None, :], (3, 3, Ws, C4))
    wmask = jnp.ones((3, Ws), jnp.float32)                         # indexed by (kx, w)
    wmask = wmask.at[0, 0].set(0.0).at[2, Ws - 1].set(0.0)
    w_rows = (w_tiled * wmask[None, :, :, None]).reshape(9, 1, WC4)
    b1_row = jnp.broadcast_to(b1[None, :], (Ws, C4)).reshape(1, WC4)

    # pointwise 1x1 as a block-diagonal matmul over the packed lane axis; fold BN2 scale.
    w_pw_s = w_pw.astype(jnp.float32) * s2[None, :]                # (C4, C2)
    w_big = jnp.kron(jnp.eye(Ws, dtype=jnp.float32), w_pw_s)       # (Ws*C4, Ws*C2)
    b2_row = jnp.broadcast_to(b2[None, :], (Ws, C2)).reshape(1, WC2)

    kernel = functools.partial(_slicesamp_kernel, c4=C4)
    out_pack = pl.pallas_call(
        kernel,
        out_shape=jax.ShapeDtypeStruct((N, Hs, WC2), x_nchw.dtype),
        grid_spec=pltpu.PrefetchScalarGridSpec(
            num_scalar_prefetch=0,
            grid=(N,),
            in_specs=[
                pl.BlockSpec((1, Hs, WC4), lambda n: (n, 0, 0)),
                pl.BlockSpec((9, 1, WC4), lambda n: (0, 0, 0)),
                pl.BlockSpec((1, WC4), lambda n: (0, 0)),
                pl.BlockSpec((WC4, WC2), lambda n: (0, 0)),
                pl.BlockSpec((1, WC2), lambda n: (0, 0)),
            ],
            out_specs=pl.BlockSpec((1, Hs, WC2), lambda n: (n, 0, 0)),
        ),
        compiler_params=pltpu.CompilerParams(dimension_semantics=("parallel",)),
    )(x_pack, w_rows, b1_row, w_big, b2_row)

    # unpack lanes -> (N, Hs, Ws, C2) -> NCHW
    out = out_pack.reshape(N, Hs, Ws, C2)
    return jnp.transpose(out, (0, 3, 1, 2))


def _reference(x_nchw, w_dw, bn1, w_pw, bn2):
    """Pure-JAX reference (same math, lax conv) for validation."""
    N, C1, H, W = x_nchw.shape
    C4 = 4 * C1
    x_s2d = jnp.concatenate(
        [x_nchw[:, :, 0::2, 0::2], x_nchw[:, :, 1::2, 0::2],
         x_nchw[:, :, 0::2, 1::2], x_nchw[:, :, 1::2, 1::2]], axis=1)
    x = jnp.transpose(x_s2d, (0, 2, 3, 1))                         # NHWC
    rhs = w_dw.reshape(3, 3, 1, C4)                                # HWIO (depthwise)
    dw = lax.conv_general_dilated(
        x, rhs, window_strides=(1, 1), padding="SAME",
        dimension_numbers=("NHWC", "HWIO", "NHWC"), feature_group_count=C4)
    g1, be1, m1, v1, e1 = bn1
    dw = _gelu_exact((dw - m1) / jnp.sqrt(v1 + e1) * g1 + be1)
    y = jnp.einsum("nhwc,cd->nhwd", dw, w_pw)
    g2, be2, m2, v2, e2 = bn2
    y = _gelu_exact((y - m2) / jnp.sqrt(v2 + e2) * g2 + be2)
    return jnp.transpose(y, (0, 3, 1, 2))


if __name__ == "__main__":
    key = jax.random.PRNGKey(0)
    k_x, k_dw, k_pw, k_g1, k_b1, k_g2, k_b2 = jax.random.split(key, 7)

    N, C1, H, W = 2, 4, 16, 16
    C4, C2 = 4 * C1, 8
    eps = 1e-5

    x = jax.random.normal(k_x, (N, C1, H, W), jnp.float32)

    # deterministic synthetic parameters (not a checkpoint load)
    w_dw = jax.random.normal(k_dw, (3, 3, C4), jnp.float32) * 0.2   # depthwise 3x3
    w_pw = jax.random.normal(k_pw, (C4, C2), jnp.float32) * 0.2     # pointwise 1x1
    # BatchNorm params (inference semantics: running stats). TODO(synk): training-mode
    # batch statistics not reproduced; inference BN folded to scale/bias is used instead.
    bn1 = (1.0 + 0.1 * jax.random.normal(k_g1, (C4,), jnp.float32),
           0.1 * jax.random.normal(k_b1, (C4,), jnp.float32),
           jnp.zeros((C4,), jnp.float32), jnp.ones((C4,), jnp.float32), eps)
    bn2 = (1.0 + 0.1 * jax.random.normal(k_g2, (C2,), jnp.float32),
           0.1 * jax.random.normal(k_b2, (C2,), jnp.float32),
           jnp.zeros((C2,), jnp.float32), jnp.ones((C2,), jnp.float32), eps)

    out = slicesamp_pallas(x, w_dw, bn1, w_pw, bn2)
    out = jax.block_until_ready(out)

    ref = jax.block_until_ready(_reference(x, w_dw, bn1, w_pw, bn2))
    assert out.shape == (N, C2, H // 2, W // 2), out.shape
    assert jnp.allclose(out, ref, atol=1e-4, rtol=1e-4), float(jnp.max(jnp.abs(out - ref)))

    print("KERNEL_OK")
</pallas_src>

<mosaic_0001>
module attributes {stable_mosaic.version = 11 : i64} {
  func.func @_slicesamp_kernel(%arg0: i32, %arg1: memref<1x8x128xf32, #tpu.memory_space<vmem>>, %arg2: memref<9x1x128xf32, #tpu.memory_space<vmem>>, %arg3: memref<1x128xf32, #tpu.memory_space<vmem>>, %arg4: memref<128x64xf32, #tpu.memory_space<vmem>>, %arg5: memref<1x64xf32, #tpu.memory_space<vmem>>, %arg6: memref<1x8x64xf32, #tpu.memory_space<vmem>>) attributes {dimension_semantics = [#tpu.dimension_semantics<parallel>], iteration_bounds = array<i64: 2>, scalar_prefetch = 0 : i64, scratch_operands = 0 : i64, tpu.core_type = #tpu.core_type<tc>, window_params = [{transform_indices = @transform_0, window_bounds = array<i64: 1, 8, 128>}, {pipeline_mode = #tpu.pipeline_mode<synchronous>, transform_indices = @transform_1, window_bounds = array<i64: 9, 1, 128>}, {pipeline_mode = #tpu.pipeline_mode<synchronous>, transform_indices = @transform_2, window_bounds = array<i64: 1, 128>}, {pipeline_mode = #tpu.pipeline_mode<synchronous>, transform_indices = @transform_3, window_bounds = array<i64: 128, 64>}, {pipeline_mode = #tpu.pipeline_mode<synchronous>, transform_indices = @transform_4, window_bounds = array<i64: 1, 64>}, {transform_indices = @transform_5, window_bounds = array<i64: 1, 8, 64>}]} {
    %c0 = arith.constant 0 : index
    %c0_0 = arith.constant 0 : index
    %c0_1 = arith.constant 0 : index
    %0 = vector.load %arg1[%c0, %c0_0, %c0_1] : memref<1x8x128xf32, #tpu.memory_space<vmem>>, vector<1x8x128xf32>
    %1 = vector.shape_cast %0 : vector<1x8x128xf32> to vector<8x128xf32>
    %c112_i32 = arith.constant 112 : i32
    %2 = tpu.dynamic_rotate %1 by %c112_i32 dim 1 : vector<8x128xf32>, i32 -> vector<8x128xf32>
    %c16_i32 = arith.constant 16 : i32
    %3 = tpu.dynamic_rotate %1 by %c16_i32 dim 1 : vector<8x128xf32>, i32 -> vector<8x128xf32>
    %c0_2 = arith.constant 0 : index
    %c0_3 = arith.constant 0 : index
    %c0_4 = arith.constant 0 : index
    %4 = vector.load %arg2[%c0_2, %c0_3, %c0_4] : memref<9x1x128xf32, #tpu.memory_space<vmem>>, vector<1x1x128xf32>
    %5 = vector.shape_cast %4 : vector<1x1x128xf32> to vector<1x128xf32>
    %6 = vector.broadcast %5 : vector<1x128xf32> to vector<8x128xf32>
    %7 = arith.mulf %3, %6 : vector<8x128xf32>
    %c1 = arith.constant 1 : index
    %c0_5 = arith.constant 0 : index
    %c0_6 = arith.constant 0 : index
    %8 = vector.load %arg2[%c1, %c0_5, %c0_6] : memref<9x1x128xf32, #tpu.memory_space<vmem>>, vector<1x1x128xf32>
    %9 = vector.shape_cast %8 : vector<1x1x128xf32> to vector<1x128xf32>
    %10 = vector.broadcast %9 : vector<1x128xf32> to vector<8x128xf32>
    %11 = arith.mulf %1, %10 : vector<8x128xf32>
    %12 = arith.addf %7, %11 : vector<8x128xf32>
    %c2 = arith.constant 2 : index
    %c0_7 = arith.constant 0 : index
    %c0_8 = arith.constant 0 : index
    %13 = vector.load %arg2[%c2, %c0_7, %c0_8] : memref<9x1x128xf32, #tpu.memory_space<vmem>>, vector<1x1x128xf32>
    %14 = vector.shape_cast %13 : vector<1x1x128xf32> to vector<1x128xf32>
    %15 = vector.broadcast %14 : vector<1x128xf32> to vector<8x128xf32>
    %16 = arith.mulf %2, %15 : vector<8x128xf32>
    %17 = arith.addf %12, %16 : vector<8x128xf32>
    %c3 = arith.constant 3 : index
    %c0_9 = arith.constant 0 : index
    %c0_10 = arith.constant 0 : index
    %18 = vector.load %arg2[%c3, %c0_9, %c0_10] : memref<9x1x128xf32, #tpu.memory_space<vmem>>, vector<1x1x128xf32>
    %19 = vector.shape_cast %18 : vector<1x1x128xf32> to vector<1x128xf32>
    %20 = vector.broadcast %19 : vector<1x128xf32> to vector<8x128xf32>
    %21 = arith.mulf %3, %20 : vector<8x128xf32>
    %c4 = arith.constant 4 : index
    %c0_11 = arith.constant 0 : index
    %c0_12 = arith.constant 0 : index
    %22 = vector.load %arg2[%c4, %c0_11, %c0_12] : memref<9x1x128xf32, #tpu.memory_space<vmem>>, vector<1x1x128xf32>
    %23 = vector.shape_cast %22 : vector<1x1x128xf32> to vector<1x128xf32>
    %24 = vector.broadcast %23 : vector<1x128xf32> to vector<8x128xf32>
    %25 = arith.mulf %1, %24 : vector<8x128xf32>
    %26 = arith.addf %21, %25 : vector<8x128xf32>
    %c5 = arith.constant 5 : index
    %c0_13 = arith.constant 0 : index
    %c0_14 = arith.constant 0 : index
    %27 = vector.load %arg2[%c5, %c0_13, %c0_14] : memref<9x1x128xf32, #tpu.memory_space<vmem>>, vector<1x1x128xf32>
    %28 = vector.shape_cast %27 : vector<1x1x128xf32> to vector<1x128xf32>
    %29 = vector.broadcast %28 : vector<1x128xf32> to vector<8x128xf32>
    %30 = arith.mulf %2, %29 : vector<8x128xf32>
    %31 = arith.addf %26, %30 : vector<8x128xf32>
    %c6 = arith.constant 6 : index
    %c0_15 = arith.constant 0 : index
    %c0_16 = arith.constant 0 : index
    %32 = vector.load %arg2[%c6, %c0_15, %c0_16] : memref<9x1x128xf32, #tpu.memory_space<vmem>>, vector<1x1x128xf32>
    %33 = vector.shape_cast %32 : vector<1x1x128xf32> to vector<1x128xf32>
    %34 = vector.broadcast %33 : vector<1x128xf32> to vector<8x128xf32>
    %35 = arith.mulf %3, %34 : vector<8x128xf32>
    %c7 = arith.constant 7 : index
    %c0_17 = arith.constant 0 : index
    %c0_18 = arith.constant 0 : index
    %36 = vector.load %arg2[%c7, %c0_17, %c0_18] : memref<9x1x128xf32, #tpu.memory_space<vmem>>, vector<1x1x128xf32>
    %37 = vector.shape_cast %36 : vector<1x1x128xf32> to vector<1x128xf32>
    %38 = vector.broadcast %37 : vector<1x128xf32> to vector<8x128xf32>
    %39 = arith.mulf %1, %38 : vector<8x128xf32>
    %40 = arith.addf %35, %39 : vector<8x128xf32>
    %c8 = arith.constant 8 : index
    %c0_19 = arith.constant 0 : index
    %c0_20 = arith.constant 0 : index
    %41 = vector.load %arg2[%c8, %c0_19, %c0_20] : memref<9x1x128xf32, #tpu.memory_space<vmem>>, vector<1x1x128xf32>
    %42 = vector.shape_cast %41 : vector<1x1x128xf32> to vector<1x128xf32>
    %43 = vector.broadcast %42 : vector<1x128xf32> to vector<8x128xf32>
    %44 = arith.mulf %2, %43 : vector<8x128xf32>
    %45 = arith.addf %40, %44 : vector<8x128xf32>
    %46 = tpu.iota {dimensions = array<i32: 0>} : vector<8x128xi32>
    %c0_i32 = arith.constant 0 : i32
    %47 = vector.broadcast %c0_i32 : i32 to vector<8x128xi32>
    %48 = arith.cmpi sgt, %46, %47 : vector<8x128xi32>
    %c1_i32 = arith.constant 1 : i32
    %49 = tpu.dynamic_rotate %17 by %c1_i32 dim 0 : vector<8x128xf32>, i32 -> vector<8x128xf32>
    %cst = arith.constant 0.000000e+00 : f32
    %50 = vector.broadcast %cst : f32 to vector<8x128xf32>
    %51 = arith.select %48, %49, %50 : vector<8x128xi1>, vector<8x128xf32>
    %52 = arith.addf %31, %51 : vector<8x128xf32>
    %c7_i32 = arith.constant 7 : i32
    %53 = vector.broadcast %c7_i32 : i32 to vector<8x128xi32>
    %54 = arith.cmpi slt, %46, %53 : vector<8x128xi32>
    %c7_i32_21 = arith.constant 7 : i32
    %55 = tpu.dynamic_rotate %45 by %c7_i32_21 dim 0 : vector<8x128xf32>, i32 -> vector<8x128xf32>
    %cst_22 = arith.constant 0.000000e+00 : f32
    %56 = vector.broadcast %cst_22 : f32 to vector<8x128xf32>
    %57 = arith.select %54, %55, %56 : vector<8x128xi1>, vector<8x128xf32>
    %58 = arith.addf %52, %57 : vector<8x128xf32>
    %c0_23 = arith.constant 0 : index
    %c0_24 = arith.constant 0 : index
    %59 = vector.load %arg3[%c0_23, %c0_24] : memref<1x128xf32, #tpu.memory_space<vmem>>, vector<1x128xf32>
    %60 = vector.broadcast %59 : vector<1x128xf32> to vector<8x128xf32>
    %61 = arith.addf %58, %60 : vector<8x128xf32>
    %cst_25 = arith.constant 5.000000e-01 : f32
    %62 = vector.broadcast %cst_25 : f32 to vector<8x128xf32>
    %63 = arith.mulf %62, %61 : vector<8x128xf32>
    %cst_26 = arith.constant 2.000000e+00 : f32
    %64 = math.sqrt %cst_26 : f32
    %cst_27 = arith.constant 1.000000e+00 : f32
    %65 = arith.divf %cst_27, %64 : f32
    %66 = vector.broadcast %65 : f32 to vector<8x128xf32>
    %67 = arith.mulf %61, %66 : vector<8x128xf32>
    %68 = math.erf %67 : vector<8x128xf32>
    %cst_28 = arith.constant 1.000000e+00 : f32
    %69 = vector.broadcast %cst_28 : f32 to vector<8x128xf32>
    %70 = arith.addf %69, %68 : vector<8x128xf32>
    %71 = arith.mulf %63, %70 : vector<8x128xf32>
    %c0_29 = arith.constant 0 : index
    %c0_30 = arith.constant 0 : index
    %72 = vector.load %arg4[%c0_29, %c0_30] : memref<128x64xf32, #tpu.memory_space<vmem>>, vector<128x64xf32>
    %cst_31 = arith.constant dense<0.000000e+00> : vector<8x64xf32>
    %73 = tpu.matmul %71, %72, %cst_31 {dimension_numbers = #tpu.dot_dimension_numbers<[1], [0], [0], [1], [0, 0, 1, 1], [], []>} : vector<8x128xf32>, vector<128x64xf32>, vector<8x64xf32> -> vector<8x64xf32>
    %c0_32 = arith.constant 0 : index
    %c0_33 = arith.constant 0 : index
    %74 = vector.load %arg5[%c0_32, %c0_33] : memref<1x64xf32, #tpu.memory_space<vmem>>, vector<1x64xf32>
    %75 = vector.broadcast %74 : vector<1x64xf32> to vector<8x64xf32>
    %76 = arith.addf %73, %75 : vector<8x64xf32>
    %cst_34 = arith.constant 5.000000e-01 : f32
    %77 = vector.broadcast %cst_34 : f32 to vector<8x64xf32>
    %78 = arith.mulf %77, %76 : vector<8x64xf32>
    %cst_35 = arith.constant 2.000000e+00 : f32
    %79 = math.sqrt %cst_35 : f32
    %cst_36 = arith.constant 1.000000e+00 : f32
    %80 = arith.divf %cst_36, %79 : f32
    %81 = vector.broadcast %80 : f32 to vector<8x64xf32>
    %82 = arith.mulf %76, %81 : vector<8x64xf32>
    %83 = math.erf %82 : vector<8x64xf32>
    %cst_37 = arith.constant 1.000000e+00 : f32
    %84 = vector.broadcast %cst_37 : f32 to vector<8x64xf32>
    %85 = arith.addf %84, %83 : vector<8x64xf32>
    %86 = arith.mulf %78, %85 : vector<8x64xf32>
    %c0_38 = arith.constant 0 : index
    %c0_39 = arith.constant 0 : index
    %c0_40 = arith.constant 0 : index
    %87 = vector.load %arg6[%c0_38, %c0_39, %c0_40] : memref<1x8x64xf32, #tpu.memory_space<vmem>>, vector<1x8x64xf32>
    %88 = vector.shape_cast %87 : vector<1x8x64xf32> to vector<8x64xf32>
    %89 = vector.shape_cast %86 : vector<8x64xf32> to vector<1x8x64xf32>
    tpu.vector_store %arg6[%c0_38, %c0_39, %c0_40], %89 {strides = array<i32>} : memref<1x8x64xf32, #tpu.memory_space<vmem>>, vector<1x8x64xf32>,
    return
  }
  func.func @transform_0(%arg0: i32) -> (i32, i32, i32) {
    %c0_i32 = arith.constant 0 : i32
    %c0_i32_0 = arith.constant 0 : i32
    %c0_i32_1 = arith.constant 0 : i32
    return %arg0, %c0_i32, %c0_i32_0 : i32, i32, i32
  }
  func.func @transform_1(%arg0: i32) -> (i32, i32, i32) {
    %c0_i32 = arith.constant 0 : i32
    %c0_i32_0 = arith.constant 0 : i32
    %c0_i32_1 = arith.constant 0 : i32
    %c0_i32_2 = arith.constant 0 : i32
    return %c0_i32, %c0_i32_0, %c0_i32_1 : i32, i32, i32
  }
  func.func @transform_2(%arg0: i32) -> (i32, i32) {
    %c0_i32 = arith.constant 0 : i32
    %c0_i32_0 = arith.constant 0 : i32
    %c0_i32_1 = arith.constant 0 : i32
    return %c0_i32, %c0_i32_0 : i32, i32
  }
  func.func @transform_3(%arg0: i32) -> (i32, i32) {
    %c0_i32 = arith.constant 0 : i32
    %c0_i32_0 = arith.constant 0 : i32
    %c0_i32_1 = arith.constant 0 : i32
    return %c0_i32, %c0_i32_0 : i32, i32
  }
  func.func @transform_4(%arg0: i32) -> (i32, i32) {
    %c0_i32 = arith.constant 0 : i32
    %c0_i32_0 = arith.constant 0 : i32
    %c0_i32_1 = arith.constant 0 : i32
    return %c0_i32, %c0_i32_0 : i32, i32
  }
  func.func @transform_5(%arg0: i32) -> (i32, i32, i32) {
    %c0_i32 = arith.constant 0 : i32
    %c0_i32_0 = arith.constant 0 : i32
    %c0_i32_1 = arith.constant 0 : i32
    return %arg0, %c0_i32, %c0_i32_0 : i32, i32, i32
  }
}

</mosaic_0001>

<llo_original>
// kernel: tpu_custom_call.1
$region0: #{tpu_custom_call.1}
  #allocation0 [shape = 'u32[]', space=smem, size = 0x4, offset = 0x4, fixed_abs, tag = 'smem constant byte address 0x4 - core index']
  #allocation1 [shape = 'u32[72,128]{1,0:T(1,128)}', space=vmem, size = 0x9000, scoped, tag = 'internal scratch']
  %s0 = inlined_call_operand.vmem [shape: f32[2,8,128], index: 0, kind: input, shape index: {}]
  %s1 = inlined_call_operand.vmem [shape: f32[9,1,128], index: 1, kind: input, shape index: {}]
  %s2 = inlined_call_operand.vmem [shape: f32[1,128], index: 2, kind: input, shape index: {}]
  %s3 = inlined_call_operand.vmem [shape: f32[128,64], index: 3, kind: input, shape index: {}]
  %s4 = inlined_call_operand.vmem [shape: f32[1,64], index: 4, kind: input, shape index: {}]
  %s5 = inlined_call_operand.hbm [shape: f32[2,8,64], index: 5, kind: output, shape index: {}]
  %s6 = sld [smem:[#allocation0]]
  $region53: #{tpu_custom_call.1} parent=0
    _
  %s8 = ssub.s32 1, %s6
  %s9 = scalar_select 0, %s8, %s6
  $region1: #{tpu_custom_call.1} parent=0
    #allocation2 [shape = 'u8[8192]{0}', space=vmem, size = 0x2000, scoped, tag = 'output window, operand 0']
    #allocation3 [shape = 's32[2]{0}', space=sflag, size = 0x8, scoped, tag = 'scoped memory for tpu_custom_call.1']
    %10 = vsyncpa [#allocation3], 0
    %s11 = scalar_lea.sflag [#allocation3], 1
    %12 = vsyncpa %s11, 0
    loop: start=0, step=1, limit=4
    $region2: #{tpu_custom_call.1} parent=1 // loop_pre_header
      _
    $region3: #{tpu_custom_call.1} parent=1 // loop_header
      %s14 = sphi 0, %s18
      %p15 = scmp.ge.s32.totalorder %s14, 4
      %s24 = sphi 0, %s26
      %s27 = sphi 0, %s24
      %s28 = sphi 0, %s27
      %s44 = sphi 0, %s28
      %s48 = sphi 0, %s48
      %s50 = sphi 0, %s48
      %s51 = sphi 0, %s50
      %s65 = sphi 0, %s51
      %s69 = sphi 0, %s69
      %s71 = sphi 0, %s69
      %s72 = sphi 0, %s71
      %s86 = sphi 0, %s72
      %s90 = sphi 0, %s90
      %s92 = sphi 0, %s90
      %s93 = sphi 0, %s92
      %s107 = sphi 0, %s93
      %s111 = sphi 0, %s111
      %s113 = sphi 0, %s111
      %s114 = sphi 0, %s113
      %s128 = sphi 0, %s114
      %s134 = sphi 0, %s136
      %s137 = sphi 0, %s134
      %s138 = sphi 0, %s137
      %s154 = sphi 0, %s138
    $region4: #{tpu_custom_call.1} parent=1 // loop_header_branch
      %17 = sbr.rel (%p15) target = $region8
    $region5: #{tpu_custom_call.1} parent=1 // loop_body
      %s19 = ssub.s32 %s14, 1
      %s20 = ssub.s32 %s14, 2
      %s21 = sadd.s32 %s14, 1
      %s22 = ssub.s32 %s14, %s21
      %p23 = scmp.eq.s32.totalorder %s22, 0
      %s25 = sadd.s32 %s24, 1
      %s26 = scalar_select %p23, %s24, %s25
      %p29 = pneg %p23
      %p30 = scmp.eq.s32.totalorder %s14, 1
      %p31 = por %p29, %p30
      %p32 = scmp.ne.s32.totalorder %s24, %s27
      %p33 = scmp.eq.s32.totalorder %s14, 0
      %p34 = por %p32, %p33
      %p35 = scmp.ne.s32.totalorder %s24, %s27
      %p36 = scmp.eq.s32.totalorder %s19, 1
      %p37 = por %p35, %p36
      %p38 = scmp.ne.s32.totalorder %s27, %s28
      %p39 = scmp.eq.s32.totalorder %s19, 0
      %p40 = por %p38, %p39
      %p41 = scmp.ne.s32.totalorder %s27, %s28
      %p42 = scmp.eq.s32.totalorder %s20, 1
      %p43 = por %p41, %p42
      %p45 = scmp.ne.s32.totalorder %s28, %s44
      %p46 = scmp.eq.s32.totalorder %s20, 0
      %p47 = por %p45, %p46
      %s49 = sadd.s32 %s48, 1
      %p52 = scmp.eq.s32.totalorder %s14, 1
      %p53 = scmp.ne.s32.totalorder %s48, %s50
      %p54 = scmp.eq.s32.totalorder %s14, 0
      %p55 = por %p53, %p54
      %p56 = scmp.ne.s32.totalorder %s48, %s50
      %p57 = scmp.eq.s32.totalorder %s19, 1
      %p58 = por %p56, %p57
      %p59 = scmp.ne.s32.totalorder %s50, %s51
      %p60 = scmp.eq.s32.totalorder %s19, 0
      %p61 = por %p59, %p60
      %p62 = scmp.ne.s32.totalorder %s50, %s51
      %p63 = scmp.eq.s32.totalorder %s20, 1
      %p64 = por %p62, %p63
      %p66 = scmp.ne.s32.totalorder %s51, %s65
      %p67 = scmp.eq.s32.totalorder %s20, 0
      %p68 = por %p66, %p67
      %s70 = sadd.s32 %s69, 1
      %p73 = scmp.eq.s32.totalorder %s14, 1
      %p74 = scmp.ne.s32.totalorder %s69, %s71
      %p75 = scmp.eq.s32.totalorder %s14, 0
      %p76 = por %p74, %p75
      %p77 = scmp.ne.s32.totalorder %s69, %s71
      %p78 = scmp.eq.s32.totalorder %s19, 1
      %p79 = por %p77, %p78
      %p80 = scmp.ne.s32.totalorder %s71, %s72
      %p81 = scmp.eq.s32.totalorder %s19, 0
      %p82 = por %p80, %p81
      %p83 = scmp.ne.s32.totalorder %s71, %s72
      %p84 = scmp.eq.s32.totalorder %s20, 1
      %p85 = por %p83, %p84
      %p87 = scmp.ne.s32.totalorder %s72, %s86
      %p88 = scmp.eq.s32.totalorder %s20, 0
      %p89 = por %p87, %p88
      %s91 = sadd.s32 %s90, 1
      %p94 = scmp.eq.s32.totalorder %s14, 1
      %p95 = scmp.ne.s32.totalorder %s90, %s92
      %p96 = scmp.eq.s32.totalorder %s14, 0
      %p97 = por %p95, %p96
      %p98 = scmp.ne.s32.totalorder %s90, %s92
      %p99 = scmp.eq.s32.totalorder %s19, 1
      %p100 = por %p98, %p99
      %p101 = scmp.ne.s32.totalorder %s92, %s93
      %p102 = scmp.eq.s32.totalorder %s19, 0
      %p103 = por %p101, %p102
      %p104 = scmp.ne.s32.totalorder %s92, %s93
      %p105 = scmp.eq.s32.totalorder %s20, 1
      %p106 = por %p104, %p105
      %p108 = scmp.ne.s32.totalorder %s93, %s107
      %p109 = scmp.eq.s32.totalorder %s20, 0
      %p110 = por %p108, %p109
      %s112 = sadd.s32 %s111, 1
      %p115 = scmp.eq.s32.totalorder %s14, 1
      %p116 = scmp.ne.s32.totalorder %s111, %s113
      %p117 = scmp.eq.s32.totalorder %s14, 0
      %p118 = por %p116, %p117
      %p119 = scmp.ne.s32.totalorder %s111, %s113
      %p120 = scmp.eq.s32.totalorder %s19, 1
      %p121 = por %p119, %p120
      %p122 = scmp.ne.s32.totalorder %s113, %s114
      %p123 = scmp.eq.s32.totalorder %s19, 0
      %p124 = por %p122, %p123
      %p125 = scmp.ne.s32.totalorder %s113, %s114
      %p126 = scmp.eq.s32.totalorder %s20, 1
      %p127 = por %p125, %p126
      %p129 = scmp.ne.s32.totalorder %s114, %s128
      %p130 = scmp.eq.s32.totalorder %s20, 0
      %p131 = por %p129, %p130
      %s132 = ssub.s32 %s14, %s21
      %p133 = scmp.eq.s32.totalorder %s132, 0
      %s135 = sadd.s32 %s134, 1
      %s136 = scalar_select %p133, %s134, %s135
      %p139 = pneg %p133
      %p140 = scmp.eq.s32.totalorder %s14, 1
      %p141 = por %p139, %p140
      %p142 = scmp.ne.s32.totalorder %s134, %s137
      %p143 = scmp.eq.s32.totalorder %s14, 0
      %p144 = por %p142, %p143
      %p145 = scmp.ne.s32.totalorder %s134, %s137
      %p146 = scmp.eq.s32.totalorder %s19, 1
      %p147 = por %p145, %p146
      %p148 = scmp.ne.s32.totalorder %s137, %s138
      %p149 = scmp.eq.s32.totalorder %s19, 0
      %p150 = por %p148, %p149
      %p151 = scmp.ne.s32.totalorder %s137, %s138
      %p152 = scmp.eq.s32.totalorder %s20, 1
      %p153 = por %p151, %p152
      %p155 = scmp.ne.s32.totalorder %s138, %s154
      %p156 = scmp.eq.s32.totalorder %s20, 0
      %p157 = por %p155, %p156
      %p158 = scmp.le.s32.totalorder 1, %s14
      %p159 = scmp.lt.s32.totalorder %s14, 3
      %p160 = pnand %p158, %p159
      %p161 = pneg %p160
      // Predicated region
      $region9: #{tpu_custom_call.1} parent=5 // pred_check
        _
      $region10: #{tpu_custom_call.1} parent=5 // pred_check_branch
        %163 = sbr.rel (%p160) target = $region12
      $region11: #{tpu_custom_call.1} parent=5 // pred_region
        %s164 = ssub.s32 %s14, 1
        // Predicated region
        $region13: #{tpu_custom_call.1} parent=11 // pred_check
          %p165 = pneg %p61
        $region14: #{tpu_custom_call.1} parent=11 // pred_check_branch
          %167 = sbr.rel (%p165) target = $region16
        $region15: #{tpu_custom_call.1} parent=11 // pred_region
          _
        $region16: #{tpu_custom_call.1} parent=11 // pred_fallthru
          _
        // Predicated region
        $region17: #{tpu_custom_call.1} parent=11 // pred_check
          %p168 = pneg %p82
        $region18: #{tpu_custom_call.1} parent=11 // pred_check_branch
          %170 = sbr.rel (%p168) target = $region20
        $region19: #{tpu_custom_call.1} parent=11 // pred_region
          _
        $region20: #{tpu_custom_call.1} parent=11 // pred_fallthru
          _
        // Predicated region
        $region21: #{tpu_custom_call.1} parent=11 // pred_check
          %p171 = pneg %p103
        $region22: #{tpu_custom_call.1} parent=11 // pred_check_branch
          %173 = sbr.rel (%p171) target = $region24
        $region23: #{tpu_custom_call.1} parent=11 // pred_region
          _
        $region24: #{tpu_custom_call.1} parent=11 // pred_fallthru
          _
        // Predicated region
        $region25: #{tpu_custom_call.1} parent=11 // pred_check
          %p174 = pneg %p124
        $region26: #{tpu_custom_call.1} parent=11 // pred_check_branch
          %176 = sbr.rel (%p174) target = $region28
        $region27: #{tpu_custom_call.1} parent=11 // pred_region
          _
        $region28: #{tpu_custom_call.1} parent=11 // pred_fallthru
          _
      $region12: #{tpu_custom_call.1} parent=5 // pred_fallthru
        _
      %p177 = scmp.lt.s32.totalorder %s14, 2
      // Predicated region
      $region29: #{tpu_custom_call.1} parent=5 // pred_check
        %p178 = pneg %p177
      $region30: #{tpu_custom_call.1} parent=5 // pred_check_branch
        %180 = sbr.rel (%p178) target = $region32
      $region31: #{tpu_custom_call.1} parent=5 // pred_region
        // Predicated region
        $region33: #{tpu_custom_call.1} parent=31 // pred_check
          %p181 = pneg %p34
        $region34: #{tpu_custom_call.1} parent=31 // pred_check_branch
          %183 = sbr.rel (%p181) target = $region36
        $region35: #{tpu_custom_call.1} parent=31 // pred_region
          %p184 = scmp.lt.s32.totalorder %s14, 1
          %s185 = scalar_select %p184, %s14, 1
          %s186 = smul.addr %s185, 8
          %s187 = scalar_lea.vmem %s0, %s186
        $region36: #{tpu_custom_call.1} parent=31 // pred_fallthru
          _
      $region32: #{tpu_custom_call.1} parent=5 // pred_fallthru
        _
      %p188 = scmp.le.s32.totalorder 1, %s14
      %p189 = scmp.lt.s32.totalorder %s14, 3
      %p190 = pnand %p188, %p189
      %p191 = pneg %p190
      // Predicated region
      $region37: #{tpu_custom_call.1} parent=5 // pred_check
        _
      $region38: #{tpu_custom_call.1} parent=5 // pred_check_branch
        %193 = sbr.rel (%p190) target = $region40
      $region39: #{tpu_custom_call.1} parent=5 // pred_region
        %s194 = ssub.s32 %s14, 1
        %p195 = scmp.lt.s32.totalorder %s19, 1
        %s196 = scalar_select %p195, %s19, 1
        %s197 = smul.addr %s196, 8
        %s198 = scalar_lea.vmem %s0, %s197
        %p199 = pneg %p40
        %p200 = pneg %p37
        %p201 = pneg %p61
        %p202 = pneg %p58
        %p203 = pneg %p82
        %p204 = pneg %p79
        %p205 = pneg %p103
        %p206 = pneg %p100
        %p207 = pneg %p124
        %p208 = pneg %p121
        %p209 = pneg %p150
        %p210 = pneg %p147
        %s211 = sand.u32 %s137, 1
        %s212 = scalar_lea.sflag [#allocation3], %s211
        %s213 = sand.u32 %s137, 1
        %s214 = smul.addr %s213, 8
        %s215 = scalar_lea.vmem [#allocation2], %s214
        %p216 = scmp.lt.s32.totalorder %s19, 1
        %s217 = scalar_select %p216, %s19, 1
        %s218 = smul.addr %s217, 8
        %s219 = scalar_lea.vmem %s0, %s218
        %v220 = vld [vmem:[%s219] sm:$0xff]
        %221 = vrot.lane.b32.xlu0 %v220, 112
        %v222 = vpop.permute.xlu0 %221
        %223 = vrot.lane.b32.xlu0 %v220, 16
        %v224 = vpop.permute.xlu0 %223
        %v225 = vld [vmem:[%s1] sm:$0x1]
        %v227 = vperm.slane %v225, 0
        %v229 = vmul.f32 %v224, %v227
        %s230 = scalar_lea.vmem %s1, 1
        %v231 = vld [vmem:[%s230] sm:$0x1]
        %v233 = vperm.slane %v231, 0
        %v235 = vmul.f32 %v220, %v233
        %v236 = vadd.f32 %v229, %v235
        %s237 = scalar_lea.vmem %s1, 2
        %v238 = vld [vmem:[%s237] sm:$0x1]
        %v240 = vperm.slane %v238, 0
        %v242 = vmul.f32 %v222, %v240
        %v243 = vadd.f32 %v236, %v242
        %s244 = scalar_lea.vmem %s1, 3
        %v245 = vld [vmem:[%s244] sm:$0x1]
        %v247 = vperm.slane %v245, 0
        %v249 = vmul.f32 %v224, %v247
        %s250 = scalar_lea.vmem %s1, 4
        %v251 = vld [vmem:[%s250] sm:$0x1]
        %v253 = vperm.slane %v251, 0
        %v255 = vmul.f32 %v220, %v253
        %v256 = vadd.f32 %v249, %v255
        %s257 = scalar_lea.vmem %s1, 5
        %v258 = vld [vmem:[%s257] sm:$0x1]
        %v260 = vperm.slane %v258, 0
        %v262 = vmul.f32 %v222, %v260
        %v263 = vadd.f32 %v256, %v262
        %s264 = scalar_lea.vmem %s1, 6
        %v265 = vld [vmem:[%s264] sm:$0x1]
        %v267 = vperm.slane %v265, 0
        %v269 = vmul.f32 %v224, %v267
        %s270 = scalar_lea.vmem %s1, 7
        %v271 = vld [vmem:[%s270] sm:$0x1]
        %v273 = vperm.slane %v271, 0
        %v275 = vmul.f32 %v220, %v273
        %v276 = vadd.f32 %v269, %v275
        %s277 = scalar_lea.vmem %s1, 8
        %v278 = vld [vmem:[%s277] sm:$0x1]
        %v280 = vperm.slane %v278, 0
        %v282 = vmul.f32 %v222, %v280
        %v283 = vadd.f32 %v276, %v282
        %v284 = vlaneseq
        %v285 = vshrl.u32 %v284, 7
        %vm286 = vcmp.gt.s32.totalorder %v285, 0
        %v287 = vrot.slane %v243, 7
        %v288 = vsel %vm286, %v287, 0.0
        %v289 = vadd.f32 %v263, %v288
        %vm290 = vcmp.lt.s32.totalorder %v285, 7
        %v291 = vrot.slane %v283, 1
        %v292 = vsel %vm290, %v291, 0.0
        %v293 = vadd.f32 %v289, %v292
        %v294 = vld [vmem:[%s2] sm:$0x1]
        %v296 = vperm.slane %v294, 0
        %v298 = vadd.f32 %v293, %v296
        %v299 = vmul.f32 %v298, 0.5
        %v300 = vmul.f32 %v298, 0.70710677
        %v301 = vmul.f32 %v300, %v300
        %v302 = vmin.f32 16.0, %v301
        %v303 = vmul.f32 %v302, 2.1237322e-06
        %v304 = vadd.f32 %v303, 0.00028619796
        %v305 = vmul.f32 %v302, %v304
        %v306 = vadd.f32 %v305, 0.0036580483
        %v307 = vmul.f32 %v302, %v306
        %v308 = vadd.f32 %v307, 0.05243302
        %v309 = vmul.f32 %v302, %v308
        %v310 = vadd.f32 %v309, 0.18741608
        %v311 = vmul.f32 %v302, %v310
        %v312 = vadd.f32 %v311, 1.1283791
        %v313 = vmul.f32 %v300, %v312
        %v314 = vmul.f32 %v302, 3.8918573e-05
        %v315 = vadd.f32 %v314, 0.001143296
        %v316 = vmul.f32 %v302, %v315
        %v317 = vadd.f32 %v316, 0.014752088
        %v318 = vmul.f32 %v302, %v317
        %v319 = vadd.f32 %v318, 0.112945676
        %v320 = vmul.f32 %v302, %v319
        %v321 = vadd.f32 %v320, 0.4994258
        %v322 = vmul.f32 %v302, %v321
        %v323 = vadd.f32 %v322, 1.0
        %v324 = vrcp.pop %v323
        %v325 = vmul.f32 %v323, %v324
        %v326 = vsub.f32 1.0, %v325
        %v327 = vmul.f32 %v324, %v326
        %v328 = vadd.f32 %v324, %v327
        %vm329 = vweird.f32 %v323
        %vm330 = vweird.f32 %v324
        %vm331 = vmor %vm329, %vm330
        %v332 = vsel %vm331, %v324, %v328
        %v333 = vand.u32 2147483647, %v323
        %vm334 = vcmp.eq.f32.partialorder %v333, 8.507059e+37
        %v335 = vand.u32 %v323, 2147483648
        %v336 = vor.u32 1.1754944e-38, %v335
        %v337 = vsel %vm334, %v336, %v332
        %v338 = vmul.f32 %v313, %v337
        %v339 = vmin.f32 %v338, 1.0
        %v340 = vmax.f32 %v339, -1.0
        %v341 = vadd.f32 %v340, 1.0
        %v342 = vmul.f32 %v299, %v341
        %v343 = vld [vmem:[%s3] sm:$0xff]
        %v344 = vld [vmem:[%s3 + $0x8] sm:$0xff]
        %v345 = vld [vmem:[%s3 + $0x10] sm:$0xff]
        %v346 = vld [vmem:[%s3 + $0x18] sm:$0xff]
        %v347 = vld [vmem:[%s3 + $0x20] sm:$0xff]
        %v348 = vld [vmem:[%s3 + $0x28] sm:$0xff]
        %v349 = vld [vmem:[%s3 + $0x30] sm:$0xff]
        %v350 = vld [vmem:[%s3 + $0x38] sm:$0xff]
        %v351 = vld [vmem:[%s3 + $0x40] sm:$0xff]
        %v352 = vld [vmem:[%s3 + $0x48] sm:$0xff]
        %v353 = vld [vmem:[%s3 + $0x50] sm:$0xff]
        %v354 = vld [vmem:[%s3 + $0x58] sm:$0xff]
        %v355 = vld [vmem:[%s3 + $0x60] sm:$0xff]
        %v356 = vld [vmem:[%s3 + $0x68] sm:$0xff]
        %v357 = vld [vmem:[%s3 + $0x70] sm:$0xff]
        %v358 = vld [vmem:[%s3 + $0x78] sm:$0xff]
        %v359 = vld [vmem:[%s4] sm:$0x1]
        %v361 = vperm.slane %v359, 0
        %363 = vmatpush.msra.mxu0 %v358
        %364 = vmatpush.msra.mxu0 %v357
        %365 = vmatpush.msra.mxu0 %v356
        %366 = vmatpush.msra.mxu0 %v355
        %367 = vmatpush.msra.mxu0 %v354
        %368 = vmatpush.msra.mxu0 %v353
        %369 = vmatpush.msra.mxu0 %v352
        %370 = vmatpush.msra.mxu0 %v351
        %371 = vmatpush.msra.mxu0 %v350
        %372 = vmatpush.msra.mxu0 %v349
        %373 = vmatpush.msra.mxu0 %v348
        %374 = vmatpush.msra.mxu0 %v347
        %375 = vmatpush.msra.mxu0 %v346
        %376 = vmatpush.msra.mxu0 %v345
        %377 = vmatpush.msra.mxu0 %v344
        %378 = vmatpush.msra.mxu0 %v343
        %379 = vmatmul.f32.gmra.mxu0 %v342
        %v380 = vpop.f32.mrf.mxu0
        %v381 = vadd.f32 %v361, %v380
        %382 = vdwg.mxu0
        %v383 = vmul.f32 %v381, 0.5
        %v384 = vmul.f32 %v381, 0.70710677
        %v385 = vmul.f32 %v384, %v384
        %v386 = vmin.f32 16.0, %v385
        %v387 = vmul.f32 %v386, 2.1237322e-06
        %v388 = vadd.f32 %v387, 0.00028619796
        %v389 = vmul.f32 %v386, %v388
        %v390 = vadd.f32 %v389, 0.0036580483
        %v391 = vmul.f32 %v386, %v390
        %v392 = vadd.f32 %v391, 0.05243302
        %v393 = vmul.f32 %v386, %v392
        %v394 = vadd.f32 %v393, 0.18741608
        %v395 = vmul.f32 %v386, %v394
        %v396 = vadd.f32 %v395, 1.1283791
        %v397 = vmul.f32 %v384, %v396
        %v398 = vmul.f32 %v386, 3.8918573e-05
        %v399 = vadd.f32 %v398, 0.001143296
        %v400 = vmul.f32 %v386, %v399
        %v401 = vadd.f32 %v400, 0.014752088
        %v402 = vmul.f32 %v386, %v401
        %v403 = vadd.f32 %v402, 0.112945676
        %v404 = vmul.f32 %v386, %v403
        %v405 = vadd.f32 %v404, 0.4994258
        %v406 = vmul.f32 %v386, %v405
        %v407 = vadd.f32 %v406, 1.0
        %v408 = vrcp.pop %v407
        %v409 = vmul.f32 %v407, %v408
        %v410 = vsub.f32 1.0, %v409
        %v411 = vmul.f32 %v408, %v410
        %v412 = vadd.f32 %v408, %v411
        %vm413 = vweird.f32 %v407
        %vm414 = vweird.f32 %v408
        %vm415 = vmor %vm413, %vm414
        %v416 = vsel %vm415, %v408, %v412
        %v417 = vand.u32 2147483647, %v407
        %vm418 = vcmp.eq.f32.partialorder %v417, 8.507059e+37
        %v419 = vand.u32 %v407, 2147483648
        %v420 = vor.u32 1.1754944e-38, %v419
        %v421 = vsel %vm418, %v420, %v416
        %v422 = vmul.f32 %v397, %v421
        %v423 = vmin.f32 %v422, 1.0
        %v424 = vmax.f32 %v423, -1.0
        %v425 = vadd.f32 %v424, 1.0
        %v426 = vmul.f32 %v383, %v425
        %vm427 = vcmask 523264
        %428 = vst.msk [vmem:[%s215] sm:$0xff] %vm427, %v426
        %s429 = sand.u32 %s137, 1
        %s430 = scalar_lea.sflag [#allocation3], %s429
        %s431 = sand.u32 %s137, 1
        %s432 = smul.addr %s431, 8
        %s433 = scalar_lea.vmem [#allocation2], %s432
        // Predicated region
        $region41: #{tpu_custom_call.1} parent=39 // pred_check
          %p434 = pneg %p147
        $region42: #{tpu_custom_call.1} parent=39 // pred_check_branch
          %436 = sbr.rel (%p434) target = $region44
        $region43: #{tpu_custom_call.1} parent=39 // pred_region
          %438 = vsyncadd %s430, 0
          %s439 = smul.addr %s19, 8
          %s440 = scalar_lea.hbm %s5, %s439
          %s442 = sshll.u32 %s433, 4
          %s443 = int_to_ptr.vmem [resolvable:$true] %s442
          %s444 = sshll.u32 %s440, 4
          %s445 = int_to_ptr.hbm [resolvable:$true] %s444
          %447 = dma.vmem_to_hbm [thread:$0]  %s443, 128, %s445, %s430
        $region44: #{tpu_custom_call.1} parent=39 // pred_fallthru
          _
      $region40: #{tpu_custom_call.1} parent=5 // pred_fallthru
        _
      %p448 = scmp.le.s32.totalorder 2, %s14
      // Predicated region
      $region45: #{tpu_custom_call.1} parent=5 // pred_check
        %p449 = pneg %p448
      $region46: #{tpu_custom_call.1} parent=5 // pred_check_branch
        %451 = sbr.rel (%p449) target = $region48
      $region47: #{tpu_custom_call.1} parent=5 // pred_region
        %s452 = ssub.s32 %s14, 2
        // Predicated region
        $region49: #{tpu_custom_call.1} parent=47 // pred_check
          %p453 = pneg %p153
        $region50: #{tpu_custom_call.1} parent=47 // pred_check_branch
          %455 = sbr.rel (%p453) target = $region52
        $region51: #{tpu_custom_call.1} parent=47 // pred_region
          %s456 = sand.u32 %s138, 1
          %s457 = scalar_lea.sflag [#allocation3], %s456
          %s458 = sand.u32 %s138, 1
          %s459 = smul.addr %s458, 8
          %s460 = scalar_lea.vmem [#allocation2], %s459
          %462 = dma.done %s457, 128
        $region52: #{tpu_custom_call.1} parent=47 // pred_fallthru
          _
      $region48: #{tpu_custom_call.1} parent=5 // pred_fallthru
        _
    $region6: #{tpu_custom_call.1} parent=1 // loop_footer
      %s18 = sadd.s32 1, %s14
    $region7: #{tpu_custom_call.1} parent=1 // loop_footer_branch
      %13 = sbr.rel target = $region3
    $region8: #{tpu_custom_call.1} parent=1 // loop_exit
      _
    %463 = vsyncpa [#allocation3], 1
    %s464 = scalar_lea.sflag [#allocation3], 1
    %465 = vsyncpa %s464, 1

</llo_original>
